<compile_context>
chip_gen: v6e
topology: v6e:2x2x1
jax: 0.10.0
libtpu: 0.0.40
codegen_flags: <defaults>
</compile_context>

<pallas_src>
import jax
import jax.numpy as jnp
from jax.experimental import pallas as pl
from jax.experimental.pallas import tpu as pltpu

EPS = 1e-5  # PyTorch nn.LayerNorm default


def _round_up(n, m):
    return ((n + m - 1) // m) * m


def prenorm_linear_kernel(x_ref, gamma_ref, beta_ref, w_ref, bias_ref, o_ref):
    # x_ref: (tile_rows, D), gamma/beta: (1, D), w: (D, H_pad), bias: (1, H_pad)
    x = x_ref[...].astype(jnp.float32)
    gamma = gamma_ref[...].astype(jnp.float32)
    beta = beta_ref[...].astype(jnp.float32)

    # LayerNorm over the last (lane) axis, f32 statistics, biased variance
    # (matches PyTorch nn.LayerNorm).
    mean = jnp.mean(x, axis=-1, keepdims=True)
    centered = x - mean
    var = jnp.mean(centered * centered, axis=-1, keepdims=True)
    y = (centered * jax.lax.rsqrt(var + EPS)) * gamma + beta

    # fn := Linear(dim, hidden).  Feed the MXU in the weight's native dtype
    # (bf16 weights -> bf16 matmul operands), accumulate in f32.
    out = jnp.dot(y.astype(w_ref.dtype), w_ref[...],
                  preferred_element_type=jnp.float32)
    out = out + bias_ref[...].astype(jnp.float32)
    o_ref[...] = out.astype(o_ref.dtype)


def prenorm(x, gamma, beta, w, bias, *, tile_rows=None):
    """x: (B, S, D) -> (B, S, H) where H = w.shape[1]."""
    B, S, D = x.shape
    Dw, H = w.shape
    assert Dw == D, (Dw, D)
    rows = B * S

    # --- lane-dense output: pad H up to a multiple of 128 with zero columns.
    H_pad = _round_up(H, 128)
    if H_pad != H:
        w = jnp.pad(w, ((0, 0), (0, H_pad - H)))
        bias = jnp.pad(bias, ((0, H_pad - H),))

    # --- row tiling (sublane multiple of 8); pad rows so the grid divides.
    if tile_rows is None:
        tile_rows = min(512, _round_up(rows, 8))
    tile_rows = max(8, _round_up(tile_rows, 8))
    grid_rows = pl.cdiv(rows, tile_rows)
    rows_pad = grid_rows * tile_rows

    x2 = x.reshape(rows, D)
    if rows_pad != rows:
        x2 = jnp.pad(x2, ((0, rows_pad - rows), (0, 0)))

    gamma2 = gamma.reshape(1, D)
    beta2 = beta.reshape(1, D)
    bias2 = bias.reshape(1, H_pad)

    # --- scoped VMEM: 2x-buffered x and out tiles + resident weight/params.
    est = (2 * tile_rows * D * x2.dtype.itemsize
           + 2 * tile_rows * H_pad * x.dtype.itemsize
           + D * H_pad * w.dtype.itemsize
           + (2 * D + H_pad) * 4)
    vmem_limit = int(min(64 * 1024 * 1024, max(32 * 1024 * 1024, 2 * est)))

    out2 = pl.pallas_call(
        prenorm_linear_kernel,
        out_shape=jax.ShapeDtypeStruct((rows_pad, H_pad), x.dtype),
        grid=(grid_rows,),
        in_specs=[
            pl.BlockSpec((tile_rows, D), lambda i: (i, 0)),   # streamed x tile
            pl.BlockSpec((1, D), lambda i: (0, 0)),           # gamma (resident)
            pl.BlockSpec((1, D), lambda i: (0, 0)),           # beta  (resident)
            pl.BlockSpec((D, H_pad), lambda i: (0, 0)),       # W     (resident)
            pl.BlockSpec((1, H_pad), lambda i: (0, 0)),       # bias  (resident)
        ],
        out_specs=pl.BlockSpec((tile_rows, H_pad), lambda i: (i, 0)),
        compiler_params=pltpu.CompilerParams(
            dimension_semantics=("parallel",),
            vmem_limit_bytes=vmem_limit),
    )(x2, gamma2, beta2, w, bias2)

    return out2[:rows, :H].reshape(B, S, H)


if __name__ == "__main__":
    # Small shapes consistent with the module: batch=2, seq=8, dim=32.
    B, S, D = 2, 8, 32
    H = D  # fn = Linear(dim, dim)

    key = jax.random.PRNGKey(0)
    kx, kw, kb = jax.random.split(key, 3)

    x = jax.random.normal(kx, (B, S, D), dtype=jnp.float32)

    # LayerNorm params (PyTorch default init: weight=1, bias=0).
    gamma = jnp.ones((D,), dtype=jnp.float32)
    beta = jnp.zeros((D,), dtype=jnp.float32)

    # TODO(synk): `fn` is an arbitrary submodule in PyTorch PreNorm; instantiated
    # here as a deterministic Linear(dim, dim).
    bound = 1.0 / (D ** 0.5)
    w = jax.random.uniform(kw, (D, H), minval=-bound, maxval=bound,
                           dtype=jnp.float32)
    bias = jax.random.uniform(kb, (H,), minval=-bound, maxval=bound,
                              dtype=jnp.float32)

    out = prenorm(x, gamma, beta, w, bias)
    jax.block_until_ready(out)

    # Reference check in plain JAX.
    mean = jnp.mean(x, axis=-1, keepdims=True)
    var = jnp.mean((x - mean) ** 2, axis=-1, keepdims=True)
    xn = (x - mean) / jnp.sqrt(var + EPS)
    ref = (xn * gamma + beta) @ w + bias
    assert out.shape == ref.shape, (out.shape, ref.shape)
    assert jnp.allclose(out, ref, atol=1e-4, rtol=1e-4), (
        float(jnp.max(jnp.abs(out - ref))))

    print("KERNEL_OK")
</pallas_src>

<mosaic_0001>
module attributes {stable_mosaic.version = 11 : i64} {
  func.func @prenorm_linear_kernel(%arg0: i32, %arg1: memref<16x32xf32, #tpu.memory_space<vmem>>, %arg2: memref<1x32xf32, #tpu.memory_space<vmem>>, %arg3: memref<1x32xf32, #tpu.memory_space<vmem>>, %arg4: memref<32x128xf32, #tpu.memory_space<vmem>>, %arg5: memref<1x128xf32, #tpu.memory_space<vmem>>, %arg6: memref<16x128xf32, #tpu.memory_space<vmem>>) attributes {dimension_semantics = [#tpu.dimension_semantics<parallel>], iteration_bounds = array<i64: 1>, scalar_prefetch = 0 : i64, scratch_operands = 0 : i64, tpu.core_type = #tpu.core_type<tc>, window_params = [{transform_indices = @transform_0, window_bounds = array<i64: 16, 32>}, {pipeline_mode = #tpu.pipeline_mode<synchronous>, transform_indices = @transform_1, window_bounds = array<i64: 1, 32>}, {pipeline_mode = #tpu.pipeline_mode<synchronous>, transform_indices = @transform_2, window_bounds = array<i64: 1, 32>}, {pipeline_mode = #tpu.pipeline_mode<synchronous>, transform_indices = @transform_3, window_bounds = array<i64: 32, 128>}, {pipeline_mode = #tpu.pipeline_mode<synchronous>, transform_indices = @transform_4, window_bounds = array<i64: 1, 128>}, {transform_indices = @transform_5, window_bounds = array<i64: 16, 128>}]} {
    %c0 = arith.constant 0 : index
    %c0_0 = arith.constant 0 : index
    %0 = vector.load %arg1[%c0, %c0_0] : memref<16x32xf32, #tpu.memory_space<vmem>>, vector<16x32xf32>
    %c0_1 = arith.constant 0 : index
    %c0_2 = arith.constant 0 : index
    %1 = vector.load %arg2[%c0_1, %c0_2] : memref<1x32xf32, #tpu.memory_space<vmem>>, vector<1x32xf32>
    %c0_3 = arith.constant 0 : index
    %c0_4 = arith.constant 0 : index
    %2 = vector.load %arg3[%c0_3, %c0_4] : memref<1x32xf32, #tpu.memory_space<vmem>>, vector<1x32xf32>
    %cst = arith.constant dense<0.000000e+00> : vector<16xf32>
    %3 = vector.multi_reduction <add>, %0, %cst [1] : vector<16x32xf32> to vector<16xf32>
    %4 = vector.shape_cast %3 : vector<16xf32> to vector<16x1xf32>
    %cst_5 = arith.constant 3.200000e+01 : f32
    %5 = vector.broadcast %cst_5 : f32 to vector<16x1xf32>
    %6 = arith.divf %4, %5 : vector<16x1xf32>
    %7 = vector.broadcast %6 : vector<16x1xf32> to vector<16x32xf32>
    %8 = arith.subf %0, %7 : vector<16x32xf32>
    %9 = arith.mulf %8, %8 : vector<16x32xf32>
    %cst_6 = arith.constant dense<0.000000e+00> : vector<16xf32>
    %10 = vector.multi_reduction <add>, %9, %cst_6 [1] : vector<16x32xf32> to vector<16xf32>
    %11 = vector.shape_cast %10 : vector<16xf32> to vector<16x1xf32>
    %cst_7 = arith.constant 3.200000e+01 : f32
    %12 = vector.broadcast %cst_7 : f32 to vector<16x1xf32>
    %13 = arith.divf %11, %12 : vector<16x1xf32>
    %cst_8 = arith.constant 9.99999974E-6 : f32
    %14 = vector.broadcast %cst_8 : f32 to vector<16x1xf32>
    %15 = arith.addf %13, %14 : vector<16x1xf32>
    %16 = math.rsqrt %15 : vector<16x1xf32>
    %17 = vector.broadcast %16 : vector<16x1xf32> to vector<16x32xf32>
    %18 = arith.mulf %8, %17 : vector<16x32xf32>
    %19 = vector.broadcast %1 : vector<1x32xf32> to vector<16x32xf32>
    %20 = arith.mulf %18, %19 : vector<16x32xf32>
    %21 = vector.broadcast %2 : vector<1x32xf32> to vector<16x32xf32>
    %22 = arith.addf %20, %21 : vector<16x32xf32>
    %c0_9 = arith.constant 0 : index
    %c0_10 = arith.constant 0 : index
    %23 = vector.load %arg4[%c0_9, %c0_10] : memref<32x128xf32, #tpu.memory_space<vmem>>, vector<32x128xf32>
    %cst_11 = arith.constant dense<0.000000e+00> : vector<16x128xf32>
    %24 = tpu.matmul %22, %23, %cst_11 {dimension_numbers = #tpu.dot_dimension_numbers<[1], [0], [0], [1], [0, 0, 1, 1], [], []>} : vector<16x32xf32>, vector<32x128xf32>, vector<16x128xf32> -> vector<16x128xf32>
    %c0_12 = arith.constant 0 : index
    %c0_13 = arith.constant 0 : index
    %25 = vector.load %arg5[%c0_12, %c0_13] : memref<1x128xf32, #tpu.memory_space<vmem>>, vector<1x128xf32>
    %26 = vector.broadcast %25 : vector<1x128xf32> to vector<16x128xf32>
    %27 = arith.addf %24, %26 : vector<16x128xf32>
    %c0_14 = arith.constant 0 : index
    %c0_15 = arith.constant 0 : index
    %28 = vector.load %arg6[%c0_14, %c0_15] : memref<16x128xf32, #tpu.memory_space<vmem>>, vector<16x128xf32>
    tpu.vector_store %arg6[%c0_14, %c0_15], %27 {strides = array<i32>} : memref<16x128xf32, #tpu.memory_space<vmem>>, vector<16x128xf32>,
    return
  }
  func.func @transform_0(%arg0: i32) -> (i32, i32) {
    %c0_i32 = arith.constant 0 : i32
    %c0_i32_0 = arith.constant 0 : i32
    return %arg0, %c0_i32 : i32, i32
  }
  func.func @transform_1(%arg0: i32) -> (i32, i32) {
    %c0_i32 = arith.constant 0 : i32
    %c0_i32_0 = arith.constant 0 : i32
    %c0_i32_1 = arith.constant 0 : i32
    return %c0_i32, %c0_i32_0 : i32, i32
  }
  func.func @transform_2(%arg0: i32) -> (i32, i32) {
    %c0_i32 = arith.constant 0 : i32
    %c0_i32_0 = arith.constant 0 : i32
    %c0_i32_1 = arith.constant 0 : i32
    return %c0_i32, %c0_i32_0 : i32, i32
  }
  func.func @transform_3(%arg0: i32) -> (i32, i32) {
    %c0_i32 = arith.constant 0 : i32
    %c0_i32_0 = arith.constant 0 : i32
    %c0_i32_1 = arith.constant 0 : i32
    return %c0_i32, %c0_i32_0 : i32, i32
  }
  func.func @transform_4(%arg0: i32) -> (i32, i32) {
    %c0_i32 = arith.constant 0 : i32
    %c0_i32_0 = arith.constant 0 : i32
    %c0_i32_1 = arith.constant 0 : i32
    return %c0_i32, %c0_i32_0 : i32, i32
  }
  func.func @transform_5(%arg0: i32) -> (i32, i32) {
    %c0_i32 = arith.constant 0 : i32
    %c0_i32_0 = arith.constant 0 : i32
    return %arg0, %c0_i32 : i32, i32
  }
}

</mosaic_0001>

<llo_original>
// kernel: tpu_custom_call.1
$region0: #{tpu_custom_call.1}
  #allocation0 [shape = 'u32[]', space=smem, size = 0x4, offset = 0x4, fixed_abs, tag = 'smem constant byte address 0x4 - core index']
  #allocation1 [shape = 'u32[144,128]{1,0:T(1,128)}', space=vmem, size = 0x12000, scoped, tag = 'internal scratch']
  %s0 = inlined_call_operand.hbm [shape: f32[16,32], index: 0, kind: input, shape index: {}]
  %s1 = inlined_call_operand.vmem [shape: f32[1,32], index: 1, kind: input, shape index: {}]
  %s2 = inlined_call_operand.vmem [shape: f32[1,32], index: 2, kind: input, shape index: {}]
  %s3 = inlined_call_operand.hbm [shape: f32[32,128], index: 3, kind: input, shape index: {}]
  %s4 = inlined_call_operand.vmem [shape: f32[1,128], index: 4, kind: input, shape index: {}]
  %s5 = inlined_call_operand.hbm [shape: f32[16,128], index: 5, kind: output, shape index: {}]
  %s6 = sld [smem:[#allocation0]]
  $region38: #{tpu_custom_call.1} parent=0
    _
  %s8 = ssub.s32 1, %s6
  %s9 = scalar_select 0, %s8, %s6
  $region1: #{tpu_custom_call.1} parent=0
    #allocation2 [shape = 'u8[8192]{0}', space=vmem, size = 0x2000, scoped, tag = 'input window, operand 0, single buffered']
    #allocation3 [shape = 's32[1]{0}', space=sflag, size = 0x4, scoped, tag = 'scoped memory for tpu_custom_call.1']
    #allocation4 [shape = 's32[1]{0}', space=sflag, size = 0x4, scoped, tag = 'scoped memory for tpu_custom_call.1']
    #allocation5 [shape = 'u8[16384]{0}', space=vmem, size = 0x4000, scoped, tag = 'input window, operand 3, single buffered']
    #allocation6 [shape = 's32[1]{0}', space=sflag, size = 0x4, scoped, tag = 'scoped memory for tpu_custom_call.1']
    #allocation7 [shape = 'u8[8192]{0}', space=vmem, size = 0x2000, scoped, tag = 'output window, operand 0, single buffered']
    %10 = vsyncpa [#allocation3], 0
    %11 = vsyncpa [#allocation6], 0
    %12 = vsyncpa [#allocation4], 0
    // Predicated region
    $region2: #{tpu_custom_call.1} parent=1 // pred_check
      _
    $region3: #{tpu_custom_call.1} parent=1 // pred_check_branch
      %14 = sbr.rel (0) target = $region5
    $region4: #{tpu_custom_call.1} parent=1 // pred_region
      %s16 = ssub.s32 256, 256
      %17 = vsyncadd [#allocation3], %s16
      %s18 = sshll.u32 [#allocation2], 4
      %s19 = int_to_ptr.vmem [resolvable:$true] %s18
      %24 = dma.hbm_to_vmem [thread:$0]  %s0, 256, %s19, [#allocation3], 128, 128, 8
    $region5: #{tpu_custom_call.1} parent=1 // pred_fallthru
      _
    // Predicated region
    $region6: #{tpu_custom_call.1} parent=1 // pred_check
      _
    $region7: #{tpu_custom_call.1} parent=1 // pred_check_branch
      %26 = sbr.rel (0) target = $region9
    $region8: #{tpu_custom_call.1} parent=1 // pred_region
      _
    $region9: #{tpu_custom_call.1} parent=1 // pred_fallthru
      _
    // Predicated region
    $region10: #{tpu_custom_call.1} parent=1 // pred_check
      _
    $region11: #{tpu_custom_call.1} parent=1 // pred_check_branch
      %28 = sbr.rel (0) target = $region13
    $region12: #{tpu_custom_call.1} parent=1 // pred_region
      _
    $region13: #{tpu_custom_call.1} parent=1 // pred_fallthru
      _
    // Predicated region
    $region14: #{tpu_custom_call.1} parent=1 // pred_check
      _
    $region15: #{tpu_custom_call.1} parent=1 // pred_check_branch
      %30 = sbr.rel (0) target = $region17
    $region16: #{tpu_custom_call.1} parent=1 // pred_region
      %s32 = ssub.s32 512, 512
      %33 = vsyncadd [#allocation6], %s32
      %s34 = sshll.u32 [#allocation5], 4
      %s35 = int_to_ptr.vmem [resolvable:$true] %s34
      %40 = dma.hbm_to_vmem [thread:$0]  %s3, 512, %s35, [#allocation6], 128, 128, 8
    $region17: #{tpu_custom_call.1} parent=1 // pred_fallthru
      _
    // Predicated region
    $region18: #{tpu_custom_call.1} parent=1 // pred_check
      _
    $region19: #{tpu_custom_call.1} parent=1 // pred_check_branch
      %42 = sbr.rel (0) target = $region21
    $region20: #{tpu_custom_call.1} parent=1 // pred_region
      _
    $region21: #{tpu_custom_call.1} parent=1 // pred_fallthru
      _
    // Predicated region
    $region22: #{tpu_custom_call.1} parent=1 // pred_check
      _
    $region23: #{tpu_custom_call.1} parent=1 // pred_check_branch
      %44 = sbr.rel (0) target = $region25
    $region24: #{tpu_custom_call.1} parent=1 // pred_region
      %45 = dma.done [#allocation3], 256
    $region25: #{tpu_custom_call.1} parent=1 // pred_fallthru
      _
    // Predicated region
    $region26: #{tpu_custom_call.1} parent=1 // pred_check
      _
    $region27: #{tpu_custom_call.1} parent=1 // pred_check_branch
      %47 = sbr.rel (0) target = $region29
    $region28: #{tpu_custom_call.1} parent=1 // pred_region
      %48 = dma.done [#allocation6], 512
    $region29: #{tpu_custom_call.1} parent=1 // pred_fallthru
      _
    %v49 = vld [vmem:[#allocation2] sm:$0xff]
    %v50 = vld [vmem:[#allocation2 + $0x8] sm:$0xff]
    %v51 = vld [vmem:[%s1] sm:$0x1]
    %v52 = vld [vmem:[%s2] sm:$0x1]
    %vm53 = vcmask 261120
    %v54 = vsel %vm53, %v49, 0.0
    %55 = vadd.xlane.f32.xlu0 %v54
    %v56 = vpop.xlane.xlu0 %55
    %v57 = vsel %vm53, %v50, 0.0
    %58 = vadd.xlane.f32.xlu0 %v57
    %v59 = vpop.xlane.xlu0 %58
    %v60 = vrcp.pop 32.0
    %v61 = vmul.f32 %v56, %v60
    %v62 = vmul.f32 %v59, %v60
    %v63 = vsub.f32 %v49, %v61
    %v64 = vsub.f32 %v50, %v62
    %v65 = vmul.f32 %v63, %v63
    %v66 = vmul.f32 %v64, %v64
    %v67 = vsel %vm53, %v65, 0.0
    %68 = vadd.xlane.f32.xlu0 %v67
    %v69 = vpop.xlane.xlu0 %68
    %v70 = vsel %vm53, %v66, 0.0
    %71 = vadd.xlane.f32.xlu0 %v70
    %v72 = vpop.xlane.xlu0 %71
    %v73 = vmul.f32 %v69, %v60
    %v74 = vmul.f32 %v72, %v60
    %v75 = vadd.f32 %v73, 1e-05
    %v76 = vadd.f32 %v74, 1e-05
    %v77 = vrsqrt.pop %v75
    %v78 = vrsqrt.pop %v76
    %v79 = vmul.f32 %v63, %v77
    %v80 = vmul.f32 %v64, %v78
    %v82 = vlaneseq
    %v83 = vshrl.u32 %v82, 7
    %v84 = vsub.s32 0, %v83
    %v85 = vrot.slane %v51, %v84
    %v87 = vmul.f32 %v79, %v85
    %v88 = vmul.f32 %v80, %v85
    %v90 = vlaneseq
    %v91 = vshrl.u32 %v90, 7
    %v92 = vsub.s32 0, %v91
    %v93 = vrot.slane %v52, %v92
    %v95 = vadd.f32 %v87, %v93
    %v96 = vadd.f32 %v88, %v93
    %v97 = vld [vmem:[#allocation5] sm:$0xff]
    %v98 = vld [vmem:[#allocation5 + $0x8] sm:$0xff]
    %v99 = vld [vmem:[#allocation5 + $0x10] sm:$0xff]
    %v100 = vld [vmem:[#allocation5 + $0x18] sm:$0xff]
    %v101 = vld [vmem:[%s4] sm:$0x1]
    %v103 = vlaneseq
    %v104 = vshrl.u32 %v103, 7
    %v105 = vsub.s32 0, %v104
    %v106 = vrot.slane %v101, %v105
    %v109 = vsel %vm53, %v95, 0
    %v112 = vsel %vm53, %v96, 0
    %114 = vmatprep.subr.mxu0 0.0
    %115 = vmatpush1.msra.mxu0 0.0
    %116 = vmatprep.subr.mxu0 0.0
    %117 = vmatpush1.msra.mxu0 0.0
    %118 = vmatprep.subr.mxu0 0.0
    %119 = vmatpush1.msra.mxu0 0.0
    %120 = vmatprep.subr.mxu0 0.0
    %121 = vmatpush1.msra.mxu0 0.0
    %122 = vmatprep.subr.mxu0 0.0
    %123 = vmatpush1.msra.mxu0 0.0
    %124 = vmatprep.subr.mxu0 0.0
    %125 = vmatpush1.msra.mxu0 0.0
    %126 = vmatprep.subr.mxu0 0.0
    %127 = vmatpush1.msra.mxu0 0.0
    %128 = vmatprep.subr.mxu0 0.0
    %129 = vmatpush1.msra.mxu0 0.0
    %130 = vmatprep.subr.mxu0 0.0
    %131 = vmatpush1.msra.mxu0 0.0
    %132 = vmatprep.subr.mxu0 0.0
    %133 = vmatpush1.msra.mxu0 0.0
    %134 = vmatprep.subr.mxu0 0.0
    %135 = vmatpush1.msra.mxu0 0.0
    %136 = vmatprep.subr.mxu0 0.0
    %137 = vmatpush1.msra.mxu0 0.0
    %138 = vmatprep.subr.mxu0 0.0
    %139 = vmatpush1.msra.mxu0 %v100
    %140 = vmatprep.subr.mxu0 0.0
    %141 = vmatpush1.msra.mxu0 %v99
    %142 = vmatprep.subr.mxu0 0.0
    %143 = vmatpush1.msra.mxu0 %v98
    %144 = vmatprep.subr.mxu0 0.0
    %145 = vmatpush1.msra.mxu0 %v97
    %146 = vmatprep.subr.mxu0 0.0
    %147 = vmatpush2.msra.mxu0 0.0
    %148 = vmatprep.subr.mxu0 0.0
    %149 = vmatpush2.msra.mxu0 0.0
    %150 = vmatprep.subr.mxu0 0.0
    %151 = vmatpush2.msra.mxu0 0.0
    %152 = vmatprep.subr.mxu0 0.0
    %153 = vmatpush2.msra.mxu0 0.0
    %154 = vmatprep.subr.mxu0 0.0
    %155 = vmatpush2.msra.mxu0 0.0
    %156 = vmatprep.subr.mxu0 0.0
    %157 = vmatpush2.msra.mxu0 0.0
    %158 = vmatprep.subr.mxu0 0.0
    %159 = vmatpush2.msra.mxu0 0.0
    %160 = vmatprep.subr.mxu0 0.0
    %161 = vmatpush2.msra.mxu0 0.0
    %162 = vmatprep.subr.mxu0 0.0
    %163 = vmatpush2.msra.mxu0 0.0
    %164 = vmatprep.subr.mxu0 0.0
    %165 = vmatpush2.msra.mxu0 0.0
    %166 = vmatprep.subr.mxu0 0.0
    %167 = vmatpush2.msra.mxu0 0.0
    %168 = vmatprep.subr.mxu0 0.0
    %169 = vmatpush2.msra.mxu0 0.0
    %170 = vmatprep.subr.mxu0 0.0
    %171 = vmatpush2.msra.mxu0 0.0
    %172 = vmatprep.subr.mxu0 0.0
    %173 = vmatpush2.msra.mxu0 0.0
    %174 = vmatprep.subr.mxu0 0.0
    %175 = vmatpush2.msra.mxu0 0.0
    %176 = vmatprep.subr.mxu0 0.0
    %177 = vmatpush2.msra.mxu0 0.0
    %178 = vmatprep.mubr.f32.mxu0 0.0
    %179 = vmatmul.mubr.f32.gmra.mxu0 %v109
    %v180 = vpop.f32.mrf.mxu0
    %v181 = vadd.f32 %v106, %v180
    %v182 = vpop.f32.mrf.mxu0
    %183 = vmatprep.mubr.f32.mxu0 0.0
    %184 = vmatmul.mubr.f32.gmra.mxu0 %v112
    %v185 = vpop.f32.mrf.mxu0
    %v186 = vadd.f32 %v106, %v185
    %v187 = vpop.f32.mrf.mxu0
    %188 = vdwg.mxu0
    %189 = vst [vmem:[#allocation7] sm:$0xff] %v181
    %190 = vst [vmem:[#allocation7 + $0x8] sm:$0xff] %v186
    // Predicated region
    $region30: #{tpu_custom_call.1} parent=1 // pred_check
      _
    $region31: #{tpu_custom_call.1} parent=1 // pred_check_branch
      %192 = sbr.rel (0) target = $region33
    $region32: #{tpu_custom_call.1} parent=1 // pred_region
      %s194 = ssub.s32 256, 256
      %195 = vsyncadd [#allocation4], %s194
      %s196 = sshll.u32 [#allocation7], 4
      %s197 = int_to_ptr.vmem [resolvable:$true] %s196
      %202 = dma.vmem_to_hbm [thread:$0]  %s197, 256, %s5, [#allocation4], 128, 128, 8
    $region33: #{tpu_custom_call.1} parent=1 // pred_fallthru
      _
    // Predicated region
    $region34: #{tpu_custom_call.1} parent=1 // pred_check
      _
    $region35: #{tpu_custom_call.1} parent=1 // pred_check_branch
      %204 = sbr.rel (0) target = $region37
    $region36: #{tpu_custom_call.1} parent=1 // pred_region
      %205 = dma.done [#allocation4], 256
    $region37: #{tpu_custom_call.1} parent=1 // pred_fallthru
      _
    %206 = vsyncpa [#allocation3], 1
    %207 = vsyncpa [#allocation6], 1
    %208 = vsyncpa [#allocation4], 1

</llo_original>
